<compile_context>
chip_gen: v7x
topology: tpu7x:2x2x1
jax: 0.10.0
libtpu: 0.0.40
codegen_flags: <defaults>
</compile_context>

<pallas_src>
import functools
import math

import jax
import jax.numpy as jnp
import numpy as np
from jax.experimental import pallas as pl
from jax.experimental.pallas import tpu as pltpu


def _round_up(x, m):
    return ((x + m - 1) // m) * m


def _pick_row_tile(H, W, Cin, C8):
    """Rows (of the low-res grid) handled per kernel-1 step."""
    g = 128 // math.gcd(W, 128)              # Th*W should be a multiple of 128
    cands = [d for d in range(g, H + 1, g) if H % d == 0]
    if not cands:
        return H                              # single tile; block == full array

    def step_bytes(d):                        # rough per-step VMEM estimate
        L = d * W
        xs_b = 3 * Cin * (d + 2) * W * 2      # bf16 input block
        y_b = 4 * C8 * L * 2                  # bf16 output block
        sc_b = 4 * Cin * L * 2                # bf16 merged-tap scratch
        return 2 * (xs_b + y_b) + sc_b        # x2: double buffering

    ok = [d for d in cands if d * W <= 4096 and step_bytes(d) <= 8 * 2**20]
    if not ok:
        ok = [cands[0]]
    multi = [d for d in ok if H // d >= 2]    # prefer >=2 row tiles (dual TC)
    return max(multi) if multi else max(ok)


# ---------------------------------------------------------------------------
# Kernel: sub-pixel conv-transpose (4 parity classes, merged-tap matmul)
#         + fused BatchNorm partial statistics
# ---------------------------------------------------------------------------
def _subpixel_conv_kernel(xs_ref, w_ref, y_ref, stats_ref, op_ref, *,
                          Cin, W, Th):
    # xs_ref   : (1, 1, 3, Cin, (Th+2)*W) bf16  ReLU'd, padded, W-shifted rows
    #            xs[.., sw, ci, r*W+qw] = relu(xpad)[ci, tile_row0 + r, qw+sw]
    # w_ref    : (4, C8, 4*Cin)           bf16  per parity: (Cout, tap*Cin+ci)
    # y_ref    : (1, 1, 4, C8, Th*W)      bf16  conv output, y^T per parity
    # stats_ref: (1, 1, C8, 2)            f32   per-channel [sum, sum_sq]
    # op_ref   : (4*Cin, Th*W)            bf16  merged 4-tap operand scratch
    L = Th * W
    s = None
    s2 = None
    for ph in range(2):
        for pw in range(2):
            p = 2 * ph + pw
            # assemble the merged-tap operand: row index = tap*Cin + ci
            for dh in range(2):
                for dw in range(2):
                    tap = 2 * dh + dw
                    sh = ph + dh                 # row shift inside the tile
                    sw = pw + dw                 # which W-shifted slab
                    op_ref[tap * Cin:(tap + 1) * Cin, :] = (
                        xs_ref[0, 0, sw, :, sh * W: sh * W + L])
            # one K = 4*Cin matmul per parity (f32 accumulation on the MXU)
            acc = jnp.dot(w_ref[p], op_ref[...],
                          preferred_element_type=jnp.float32)    # (C8, L)
            y_ref[0, 0, p, :, :] = acc.astype(y_ref.dtype)
            ps = acc.sum(axis=1, keepdims=True)                  # (C8, 1)
            ps2 = (acc * acc).sum(axis=1, keepdims=True)
            s = ps if s is None else s + ps
            s2 = ps2 if s2 is None else s2 + ps2
    stats_ref[0, 0, :, 0:1] = s
    stats_ref[0, 0, :, 1:2] = s2


# ---------------------------------------------------------------------------
# Wrapper:  ReLU -> ConvTranspose2d(4,2,1) -> BatchNorm2d     (NCHW in / out)
# ---------------------------------------------------------------------------
@jax.jit
def upsample_forward(x, w_t, conv_bias, gamma, beta):
    # x   : (N, Cin, H, W)      f32  NCHW
    # w_t : (Cin, Cout, 4, 4)   f32  PyTorch ConvTranspose2d weight layout
    # conv_bias is intentionally unused: a per-channel constant added before
    # train-mode BatchNorm is exactly cancelled by the mean subtraction.
    del conv_bias
    N, Cin, H, W = x.shape
    Cout = w_t.shape[1]
    C8 = _round_up(Cout, 8)                 # sublane padding only (no 128 pad)
    Th = _pick_row_tile(H, W, Cin, C8)
    T = H // Th
    L = Th * W

    # ---- staging (XLA glue): ReLU + pad(1) + halo'd row tiles + 3 W-shifts -
    xr = jnp.maximum(x, 0.0).astype(jnp.bfloat16)               # (N,Cin,H,W)
    xp = jnp.pad(xr, ((0, 0), (0, 0), (1, 1), (1, 1)))          # (N,Cin,H+2,W+2)
    xt = jnp.stack([xp[:, :, t * Th: t * Th + Th + 2, :]
                    for t in range(T)], axis=1)                 # (N,T,Cin,Th+2,W+2)
    xs = jnp.stack([xt[..., sw:sw + W] for sw in range(3)],
                   axis=2)                                      # (N,T,3,Cin,Th+2,W)
    xs = xs.reshape(N, T, 3, Cin, (Th + 2) * W)

    # ---- weights: sub-pixel decomposition of the 4x4 transposed kernel -----
    #   y[n,co,2qh+ph,2qw+pw] = sum_{ci,dh,dw}
    #       relu(xpad)[n,ci,qh+ph+dh,qw+pw+dw] * w_t[ci,co,3-ph-2dh,3-pw-2dw]
    wk = jnp.stack([
        jnp.concatenate([w_t[:, :, 3 - ph - 2 * dh, 3 - pw - 2 * dw]
                         for dh in range(2) for dw in range(2)],
                        axis=0).T                               # (Cout, 4*Cin)
        for ph in range(2) for pw in range(2)], axis=0)         # (4,Cout,4*Cin)
    wk = jnp.pad(wk, ((0, 0), (0, C8 - Cout), (0, 0))).astype(jnp.bfloat16)

    # ---- conv (+ fused BN partial statistics), grid over (batch, row tiles)
    kernel = functools.partial(_subpixel_conv_kernel, Cin=Cin, W=W, Th=Th)
    y4, stats = pl.pallas_call(
        kernel,
        out_shape=(jax.ShapeDtypeStruct((N, T, 4, C8, L), jnp.bfloat16),
                   jax.ShapeDtypeStruct((N, T, C8, 2), jnp.float32)),
        grid=(N, T),
        in_specs=[
            pl.BlockSpec((1, 1, 3, Cin, (Th + 2) * W),
                         lambda n, t: (n, t, 0, 0, 0)),
            pl.BlockSpec((4, C8, 4 * Cin), lambda n, t: (0, 0, 0)),
        ],
        out_specs=(
            pl.BlockSpec((1, 1, 4, C8, L), lambda n, t: (n, t, 0, 0, 0)),
            pl.BlockSpec((1, 1, C8, 2), lambda n, t: (n, t, 0, 0)),
        ),
        scratch_shapes=[pltpu.VMEM((4 * Cin, L), jnp.bfloat16)],
        compiler_params=pltpu.CompilerParams(
            dimension_semantics=("parallel", "parallel"),
            vmem_limit_bytes=32 * 1024 * 1024),
    )(xs, wk)

    # ---- finish BatchNorm statistics (tiny hierarchical f32 reduction) -----
    cnt = jnp.float32(N * 4 * H * W)
    tot = stats.sum(axis=(0, 1))                                # (C8, 2)
    mean = tot[:, 0] / cnt
    var = jnp.maximum(tot[:, 1] / cnt - mean * mean, 0.0)       # biased, as BN
    inv = jax.lax.rsqrt(var + 1e-5)
    gamma_p = jnp.pad(gamma.astype(jnp.float32), (0, C8 - Cout))
    beta_p = jnp.pad(beta.astype(jnp.float32), (0, C8 - Cout))
    scale = gamma_p * inv                                       # (C8,)
    shift = beta_p - mean * scale

    # ---- BN apply + depth-to-space + NCHW: one fused XLA pass over bf16 y --
    # TODO(synk): fold this epilogue into a Pallas kernel once a safe in-kernel
    # lane interleave (pw into the minor NCHW output dim) is available; today
    # the interleaving transpose is left to XLA, fused with scale/shift/cast.
    z = (y4.astype(jnp.float32) * scale[None, None, None, :, None]
         + shift[None, None, None, :, None])                    # (N,T,4,C8,L)
    z = z.reshape(N, T, 2, 2, C8, Th, W)[:, :, :, :, :Cout]
    out = z.transpose(0, 4, 1, 5, 2, 6, 3).reshape(N, Cout, 2 * H, 2 * W)
    return out
    # TODO(synk): nn.Dropout(0.5) branch (drop_out=True) not implemented; the
    # module default drop_out=False uses Identity, which is what we match.
    # TODO(synk): training-mode running_mean/running_var updates not produced
    # (forward activation only).


# ---------------------------------------------------------------------------
# Pure-JAX reference (f32, HIGHEST precision) for the correctness check
# ---------------------------------------------------------------------------
def upsample_reference(x, w_t, conv_bias, gamma, beta):
    w_conv = jnp.transpose(w_t, (1, 0, 2, 3))[:, :, ::-1, ::-1]   # OIHW, flipped
    y = jax.lax.conv_general_dilated(
        jnp.maximum(x, 0.0), w_conv,
        window_strides=(1, 1), padding=((2, 2), (2, 2)),
        lhs_dilation=(2, 2),
        dimension_numbers=("NCHW", "OIHW", "NCHW"),
        precision=jax.lax.Precision.HIGHEST)
    y = y + conv_bias[None, :, None, None]
    mean = y.mean(axis=(0, 2, 3), keepdims=True)
    var = ((y - mean) ** 2).mean(axis=(0, 2, 3), keepdims=True)
    return ((y - mean) * jax.lax.rsqrt(var + 1e-5)
            * gamma[None, :, None, None] + beta[None, :, None, None])


if __name__ == "__main__":
    key = jax.random.PRNGKey(0)
    k_x, k_w, k_b, k_g, k_be = jax.random.split(key, 5)

    # small shapes consistent with the module
    N, Cin, Cout, H, W = 2, 4, 8, 16, 16

    x = jax.random.normal(k_x, (N, Cin, H, W), jnp.float32)
    # ConvTranspose2d weight: (in_channels, out_channels, 4, 4); bias: (out,)
    w_t = jax.random.normal(k_w, (Cin, Cout, 4, 4), jnp.float32) * 0.1
    conv_bias = jax.random.normal(k_b, (Cout,), jnp.float32) * 0.1
    # BatchNorm2d affine params
    gamma = 1.0 + 0.1 * jax.random.normal(k_g, (Cout,), jnp.float32)
    beta = 0.1 * jax.random.normal(k_be, (Cout,), jnp.float32)

    out = jax.block_until_ready(upsample_forward(x, w_t, conv_bias, gamma, beta))
    assert out.shape == (N, Cout, 2 * H, 2 * W), out.shape

    ref = jax.block_until_ready(
        upsample_reference(x, w_t, conv_bias, gamma, beta))
    # bf16 MXU operands / bf16 y intermediate (f32 accumulation and f32 BN
    # stats) vs. an f32 HIGHEST-precision reference: compare at 2e-2
    # (post-BN values are O(1)).
    np.testing.assert_allclose(np.asarray(out), np.asarray(ref),
                               rtol=2e-2, atol=2e-2)

    print("KERNEL_OK")
</pallas_src>

<mosaic_0001>
module attributes {stable_mosaic.version = 11 : i64} {
  func.func @_subpixel_conv_kernel(%arg0: i32, %arg1: i32, %arg2: memref<1x1x3x4x160xbf16, #tpu.memory_space<vmem>>, %arg3: memref<4x8x16xbf16, #tpu.memory_space<vmem>>, %arg4: memref<1x1x4x8x128xbf16, #tpu.memory_space<vmem>>, %arg5: memref<1x1x8x2xf32, #tpu.memory_space<vmem>>, %arg6: memref<16x128xbf16, #tpu.memory_space<vmem>>) attributes {dimension_semantics = [#tpu.dimension_semantics<parallel>, #tpu.dimension_semantics<parallel>], iteration_bounds = array<i64: 2, 2>, scalar_prefetch = 0 : i64, scratch_operands = 1 : i64, tpu.core_type = #tpu.core_type<tc>, window_params = [{transform_indices = @transform_0, window_bounds = array<i64: 1, 1, 3, 4, 160>}, {pipeline_mode = #tpu.pipeline_mode<synchronous>, transform_indices = @transform_1, window_bounds = array<i64: 4, 8, 16>}, {transform_indices = @transform_2, window_bounds = array<i64: 1, 1, 4, 8, 128>}, {transform_indices = @transform_3, window_bounds = array<i64: 1, 1, 8, 2>}]} {
    %c0 = arith.constant 0 : index
    %c0_0 = arith.constant 0 : index
    %c0_1 = arith.constant 0 : index
    %c0_2 = arith.constant 0 : index
    %c0_3 = arith.constant 0 : index
    %0 = vector.load %arg2[%c0, %c0_0, %c0_1, %c0_2, %c0_3] : memref<1x1x3x4x160xbf16, #tpu.memory_space<vmem>>, vector<1x1x1x4x128xbf16>
    %1 = vector.shape_cast %0 : vector<1x1x1x4x128xbf16> to vector<4x128xbf16>
    %c0_4 = arith.constant 0 : index
    %c0_5 = arith.constant 0 : index
    %2 = vector.load %arg6[%c0_4, %c0_5] : memref<16x128xbf16, #tpu.memory_space<vmem>>, vector<4x128xbf16>
    tpu.vector_store %arg6[%c0_4, %c0_5], %1 {strides = array<i32>} : memref<16x128xbf16, #tpu.memory_space<vmem>>, vector<4x128xbf16>,
    %c0_6 = arith.constant 0 : index
    %c0_7 = arith.constant 0 : index
    %c1 = arith.constant 1 : index
    %c0_8 = arith.constant 0 : index
    %c0_9 = arith.constant 0 : index
    %3 = vector.load %arg2[%c0_6, %c0_7, %c1, %c0_8, %c0_9] : memref<1x1x3x4x160xbf16, #tpu.memory_space<vmem>>, vector<1x1x1x4x128xbf16>
    %4 = vector.shape_cast %3 : vector<1x1x1x4x128xbf16> to vector<4x128xbf16>
    %c4 = arith.constant 4 : index
    %c0_10 = arith.constant 0 : index
    %5 = vector.load %arg6[%c4, %c0_10] : memref<16x128xbf16, #tpu.memory_space<vmem>>, vector<4x128xbf16>
    tpu.vector_store %arg6[%c4, %c0_10], %4 {strides = array<i32>} : memref<16x128xbf16, #tpu.memory_space<vmem>>, vector<4x128xbf16>,
    %c0_11 = arith.constant 0 : index
    %c0_12 = arith.constant 0 : index
    %c0_13 = arith.constant 0 : index
    %c0_14 = arith.constant 0 : index
    %c16 = arith.constant 16 : index
    %6 = vector.load %arg2[%c0_11, %c0_12, %c0_13, %c0_14, %c16] : memref<1x1x3x4x160xbf16, #tpu.memory_space<vmem>>, vector<1x1x1x4x128xbf16>
    %7 = vector.shape_cast %6 : vector<1x1x1x4x128xbf16> to vector<4x128xbf16>
    %c8 = arith.constant 8 : index
    %c0_15 = arith.constant 0 : index
    %8 = vector.load %arg6[%c8, %c0_15] : memref<16x128xbf16, #tpu.memory_space<vmem>>, vector<4x128xbf16>
    tpu.vector_store %arg6[%c8, %c0_15], %7 {strides = array<i32>} : memref<16x128xbf16, #tpu.memory_space<vmem>>, vector<4x128xbf16>,
    %c0_16 = arith.constant 0 : index
    %c0_17 = arith.constant 0 : index
    %c1_18 = arith.constant 1 : index
    %c0_19 = arith.constant 0 : index
    %c16_20 = arith.constant 16 : index
    %9 = vector.load %arg2[%c0_16, %c0_17, %c1_18, %c0_19, %c16_20] : memref<1x1x3x4x160xbf16, #tpu.memory_space<vmem>>, vector<1x1x1x4x128xbf16>
    %10 = vector.shape_cast %9 : vector<1x1x1x4x128xbf16> to vector<4x128xbf16>
    %c12 = arith.constant 12 : index
    %c0_21 = arith.constant 0 : index
    %11 = vector.load %arg6[%c12, %c0_21] : memref<16x128xbf16, #tpu.memory_space<vmem>>, vector<4x128xbf16>
    tpu.vector_store %arg6[%c12, %c0_21], %10 {strides = array<i32>} : memref<16x128xbf16, #tpu.memory_space<vmem>>, vector<4x128xbf16>,
    %c0_22 = arith.constant 0 : index
    %c0_23 = arith.constant 0 : index
    %c0_24 = arith.constant 0 : index
    %12 = vector.load %arg3[%c0_22, %c0_23, %c0_24] : memref<4x8x16xbf16, #tpu.memory_space<vmem>>, vector<1x8x16xbf16>
    %13 = vector.shape_cast %12 : vector<1x8x16xbf16> to vector<8x16xbf16>
    %c0_25 = arith.constant 0 : index
    %c0_26 = arith.constant 0 : index
    %14 = vector.load %arg6[%c0_25, %c0_26] : memref<16x128xbf16, #tpu.memory_space<vmem>>, vector<16x128xbf16>
    %cst = arith.constant dense<0.000000e+00> : vector<8x128xf32>
    %15 = tpu.matmul %13, %14, %cst {dimension_numbers = #tpu.dot_dimension_numbers<[1], [0], [0], [1], [0, 0, 1, 1], [], []>} : vector<8x16xbf16>, vector<16x128xbf16>, vector<8x128xf32> -> vector<8x128xf32>
    %16 = arith.truncf %15 : vector<8x128xf32> to vector<8x128xbf16>
    %c0_27 = arith.constant 0 : index
    %c0_28 = arith.constant 0 : index
    %c0_29 = arith.constant 0 : index
    %c0_30 = arith.constant 0 : index
    %c0_31 = arith.constant 0 : index
    %17 = vector.load %arg4[%c0_27, %c0_28, %c0_29, %c0_30, %c0_31] : memref<1x1x4x8x128xbf16, #tpu.memory_space<vmem>>, vector<1x1x1x8x128xbf16>
    %18 = vector.shape_cast %17 : vector<1x1x1x8x128xbf16> to vector<8x128xbf16>
    %19 = vector.shape_cast %16 : vector<8x128xbf16> to vector<1x1x1x8x128xbf16>
    tpu.vector_store %arg4[%c0_27, %c0_28, %c0_29, %c0_30, %c0_31], %19 {strides = array<i32>} : memref<1x1x4x8x128xbf16, #tpu.memory_space<vmem>>, vector<1x1x1x8x128xbf16>,
    %cst_32 = arith.constant dense<0.000000e+00> : vector<8xf32>
    %20 = vector.multi_reduction <add>, %15, %cst_32 [1] : vector<8x128xf32> to vector<8xf32>
    %21 = vector.shape_cast %20 : vector<8xf32> to vector<8x1xf32>
    %22 = arith.mulf %15, %15 : vector<8x128xf32>
    %cst_33 = arith.constant dense<0.000000e+00> : vector<8xf32>
    %23 = vector.multi_reduction <add>, %22, %cst_33 [1] : vector<8x128xf32> to vector<8xf32>
    %24 = vector.shape_cast %23 : vector<8xf32> to vector<8x1xf32>
    %c0_34 = arith.constant 0 : index
    %c0_35 = arith.constant 0 : index
    %c1_36 = arith.constant 1 : index
    %c0_37 = arith.constant 0 : index
    %c0_38 = arith.constant 0 : index
    %25 = vector.load %arg2[%c0_34, %c0_35, %c1_36, %c0_37, %c0_38] : memref<1x1x3x4x160xbf16, #tpu.memory_space<vmem>>, vector<1x1x1x4x128xbf16>
    %26 = vector.shape_cast %25 : vector<1x1x1x4x128xbf16> to vector<4x128xbf16>
    %c0_39 = arith.constant 0 : index
    %c0_40 = arith.constant 0 : index
    %27 = vector.load %arg6[%c0_39, %c0_40] : memref<16x128xbf16, #tpu.memory_space<vmem>>, vector<4x128xbf16>
    tpu.vector_store %arg6[%c0_39, %c0_40], %26 {strides = array<i32>} : memref<16x128xbf16, #tpu.memory_space<vmem>>, vector<4x128xbf16>,
    %c0_41 = arith.constant 0 : index
    %c0_42 = arith.constant 0 : index
    %c2 = arith.constant 2 : index
    %c0_43 = arith.constant 0 : index
    %c0_44 = arith.constant 0 : index
    %28 = vector.load %arg2[%c0_41, %c0_42, %c2, %c0_43, %c0_44] : memref<1x1x3x4x160xbf16, #tpu.memory_space<vmem>>, vector<1x1x1x4x128xbf16>
    %29 = vector.shape_cast %28 : vector<1x1x1x4x128xbf16> to vector<4x128xbf16>
    %c4_45 = arith.constant 4 : index
    %c0_46 = arith.constant 0 : index
    %30 = vector.load %arg6[%c4_45, %c0_46] : memref<16x128xbf16, #tpu.memory_space<vmem>>, vector<4x128xbf16>
    tpu.vector_store %arg6[%c4_45, %c0_46], %29 {strides = array<i32>} : memref<16x128xbf16, #tpu.memory_space<vmem>>, vector<4x128xbf16>,
    %c0_47 = arith.constant 0 : index
    %c0_48 = arith.constant 0 : index
    %c1_49 = arith.constant 1 : index
    %c0_50 = arith.constant 0 : index
    %c16_51 = arith.constant 16 : index
    %31 = vector.load %arg2[%c0_47, %c0_48, %c1_49, %c0_50, %c16_51] : memref<1x1x3x4x160xbf16, #tpu.memory_space<vmem>>, vector<1x1x1x4x128xbf16>
    %32 = vector.shape_cast %31 : vector<1x1x1x4x128xbf16> to vector<4x128xbf16>
    %c8_52 = arith.constant 8 : index
    %c0_53 = arith.constant 0 : index
    %33 = vector.load %arg6[%c8_52, %c0_53] : memref<16x128xbf16, #tpu.memory_space<vmem>>, vector<4x128xbf16>
    tpu.vector_store %arg6[%c8_52, %c0_53], %32 {strides = array<i32>} : memref<16x128xbf16, #tpu.memory_space<vmem>>, vector<4x128xbf16>,
    %c0_54 = arith.constant 0 : index
    %c0_55 = arith.constant 0 : index
    %c2_56 = arith.constant 2 : index
    %c0_57 = arith.constant 0 : index
    %c16_58 = arith.constant 16 : index
    %34 = vector.load %arg2[%c0_54, %c0_55, %c2_56, %c0_57, %c16_58] : memref<1x1x3x4x160xbf16, #tpu.memory_space<vmem>>, vector<1x1x1x4x128xbf16>
    %35 = vector.shape_cast %34 : vector<1x1x1x4x128xbf16> to vector<4x128xbf16>
    %c12_59 = arith.constant 12 : index
    %c0_60 = arith.constant 0 : index
    %36 = vector.load %arg6[%c12_59, %c0_60] : memref<16x128xbf16, #tpu.memory_space<vmem>>, vector<4x128xbf16>
    tpu.vector_store %arg6[%c12_59, %c0_60], %35 {strides = array<i32>} : memref<16x128xbf16, #tpu.memory_space<vmem>>, vector<4x128xbf16>,
    %c1_61 = arith.constant 1 : index
    %c0_62 = arith.constant 0 : index
    %c0_63 = arith.constant 0 : index
    %37 = vector.load %arg3[%c1_61, %c0_62, %c0_63] : memref<4x8x16xbf16, #tpu.memory_space<vmem>>, vector<1x8x16xbf16>
    %38 = vector.shape_cast %37 : vector<1x8x16xbf16> to vector<8x16xbf16>
    %c0_64 = arith.constant 0 : index
    %c0_65 = arith.constant 0 : index
    %39 = vector.load %arg6[%c0_64, %c0_65] : memref<16x128xbf16, #tpu.memory_space<vmem>>, vector<16x128xbf16>
    %cst_66 = arith.constant dense<0.000000e+00> : vector<8x128xf32>
    %40 = tpu.matmul %38, %39, %cst_66 {dimension_numbers = #tpu.dot_dimension_numbers<[1], [0], [0], [1], [0, 0, 1, 1], [], []>} : vector<8x16xbf16>, vector<16x128xbf16>, vector<8x128xf32> -> vector<8x128xf32>
    %41 = arith.truncf %40 : vector<8x128xf32> to vector<8x128xbf16>
    %c0_67 = arith.constant 0 : index
    %c0_68 = arith.constant 0 : index
    %c1_69 = arith.constant 1 : index
    %c0_70 = arith.constant 0 : index
    %c0_71 = arith.constant 0 : index
    %42 = vector.load %arg4[%c0_67, %c0_68, %c1_69, %c0_70, %c0_71] : memref<1x1x4x8x128xbf16, #tpu.memory_space<vmem>>, vector<1x1x1x8x128xbf16>
    %43 = vector.shape_cast %42 : vector<1x1x1x8x128xbf16> to vector<8x128xbf16>
    %44 = vector.shape_cast %41 : vector<8x128xbf16> to vector<1x1x1x8x128xbf16>
    tpu.vector_store %arg4[%c0_67, %c0_68, %c1_69, %c0_70, %c0_71], %44 {strides = array<i32>} : memref<1x1x4x8x128xbf16, #tpu.memory_space<vmem>>, vector<1x1x1x8x128xbf16>,
    %cst_72 = arith.constant dense<0.000000e+00> : vector<8xf32>
    %45 = vector.multi_reduction <add>, %40, %cst_72 [1] : vector<8x128xf32> to vector<8xf32>
    %46 = vector.shape_cast %45 : vector<8xf32> to vector<8x1xf32>
    %47 = arith.mulf %40, %40 : vector<8x128xf32>
    %cst_73 = arith.constant dense<0.000000e+00> : vector<8xf32>
    %48 = vector.multi_reduction <add>, %47, %cst_73 [1] : vector<8x128xf32> to vector<8xf32>
    %49 = vector.shape_cast %48 : vector<8xf32> to vector<8x1xf32>
    %50 = arith.addf %21, %46 : vector<8x1xf32>
    %51 = arith.addf %24, %49 : vector<8x1xf32>
    %c0_74 = arith.constant 0 : index
    %c0_75 = arith.constant 0 : index
    %c0_76 = arith.constant 0 : index
    %c0_77 = arith.constant 0 : index
    %c16_78 = arith.constant 16 : index
    %52 = vector.load %arg2[%c0_74, %c0_75, %c0_76, %c0_77, %c16_78] : memref<1x1x3x4x160xbf16, #tpu.memory_space<vmem>>, vector<1x1x1x4x128xbf16>
    %53 = vector.shape_cast %52 : vector<1x1x1x4x128xbf16> to vector<4x128xbf16>
    %c0_79 = arith.constant 0 : index
    %c0_80 = arith.constant 0 : index
    %54 = vector.load %arg6[%c0_79, %c0_80] : memref<16x128xbf16, #tpu.memory_space<vmem>>, vector<4x128xbf16>
    tpu.vector_store %arg6[%c0_79, %c0_80], %53 {strides = array<i32>} : memref<16x128xbf16, #tpu.memory_space<vmem>>, vector<4x128xbf16>,
    %c0_81 = arith.constant 0 : index
    %c0_82 = arith.constant 0 : index
    %c1_83 = arith.constant 1 : index
    %c0_84 = arith.constant 0 : index
    %c16_85 = arith.constant 16 : index
    %55 = vector.load %arg2[%c0_81, %c0_82, %c1_83, %c0_84, %c16_85] : memref<1x1x3x4x160xbf16, #tpu.memory_space<vmem>>, vector<1x1x1x4x128xbf16>
    %56 = vector.shape_cast %55 : vector<1x1x1x4x128xbf16> to vector<4x128xbf16>
    %c4_86 = arith.constant 4 : index
    %c0_87 = arith.constant 0 : index
    %57 = vector.load %arg6[%c4_86, %c0_87] : memref<16x128xbf16, #tpu.memory_space<vmem>>, vector<4x128xbf16>
    tpu.vector_store %arg6[%c4_86, %c0_87], %56 {strides = array<i32>} : memref<16x128xbf16, #tpu.memory_space<vmem>>, vector<4x128xbf16>,
    %c0_88 = arith.constant 0 : index
    %c0_89 = arith.constant 0 : index
    %c0_90 = arith.constant 0 : index
    %c0_91 = arith.constant 0 : index
    %c32 = arith.constant 32 : index
    %58 = vector.load %arg2[%c0_88, %c0_89, %c0_90, %c0_91, %c32] : memref<1x1x3x4x160xbf16, #tpu.memory_space<vmem>>, vector<1x1x1x4x128xbf16>
    %59 = vector.shape_cast %58 : vector<1x1x1x4x128xbf16> to vector<4x128xbf16>
    %c8_92 = arith.constant 8 : index
    %c0_93 = arith.constant 0 : index
    %60 = vector.load %arg6[%c8_92, %c0_93] : memref<16x128xbf16, #tpu.memory_space<vmem>>, vector<4x128xbf16>
    tpu.vector_store %arg6[%c8_92, %c0_93], %59 {strides = array<i32>} : memref<16x128xbf16, #tpu.memory_space<vmem>>, vector<4x128xbf16>,
    %c0_94 = arith.constant 0 : index
    %c0_95 = arith.constant 0 : index
    %c1_96 = arith.constant 1 : index
    %c0_97 = arith.constant 0 : index
    %c32_98 = arith.constant 32 : index
    %61 = vector.load %arg2[%c0_94, %c0_95, %c1_96, %c0_97, %c32_98] : memref<1x1x3x4x160xbf16, #tpu.memory_space<vmem>>, vector<1x1x1x4x128xbf16>
    %62 = vector.shape_cast %61 : vector<1x1x1x4x128xbf16> to vector<4x128xbf16>
    %c12_99 = arith.constant 12 : index
    %c0_100 = arith.constant 0 : index
    %63 = vector.load %arg6[%c12_99, %c0_100] : memref<16x128xbf16, #tpu.memory_space<vmem>>, vector<4x128xbf16>
    tpu.vector_store %arg6[%c12_99, %c0_100], %62 {strides = array<i32>} : memref<16x128xbf16, #tpu.memory_space<vmem>>, vector<4x128xbf16>,
    %c2_101 = arith.constant 2 : index
    %c0_102 = arith.constant 0 : index
    %c0_103 = arith.constant 0 : index
    %64 = vector.load %arg3[%c2_101, %c0_102, %c0_103] : memref<4x8x16xbf16, #tpu.memory_space<vmem>>, vector<1x8x16xbf16>
    %65 = vector.shape_cast %64 : vector<1x8x16xbf16> to vector<8x16xbf16>
    %c0_104 = arith.constant 0 : index
    %c0_105 = arith.constant 0 : index
    %66 = vector.load %arg6[%c0_104, %c0_105] : memref<16x128xbf16, #tpu.memory_space<vmem>>, vector<16x128xbf16>
    %cst_106 = arith.constant dense<0.000000e+00> : vector<8x128xf32>
    %67 = tpu.matmul %65, %66, %cst_106 {dimension_numbers = #tpu.dot_dimension_numbers<[1], [0], [0], [1], [0, 0, 1, 1], [], []>} : vector<8x16xbf16>, vector<16x128xbf16>, vector<8x128xf32> -> vector<8x128xf32>
    %68 = arith.truncf %67 : vector<8x128xf32> to vector<8x128xbf16>
    %c0_107 = arith.constant 0 : index
    %c0_108 = arith.constant 0 : index
    %c2_109 = arith.constant 2 : index
    %c0_110 = arith.constant 0 : index
    %c0_111 = arith.constant 0 : index
    %69 = vector.load %arg4[%c0_107, %c0_108, %c2_109, %c0_110, %c0_111] : memref<1x1x4x8x128xbf16, #tpu.memory_space<vmem>>, vector<1x1x1x8x128xbf16>
    %70 = vector.shape_cast %69 : vector<1x1x1x8x128xbf16> to vector<8x128xbf16>
    %71 = vector.shape_cast %68 : vector<8x128xbf16> to vector<1x1x1x8x128xbf16>
    tpu.vector_store %arg4[%c0_107, %c0_108, %c2_109, %c0_110, %c0_111], %71 {strides = array<i32>} : memref<1x1x4x8x128xbf16, #tpu.memory_space<vmem>>, vector<1x1x1x8x128xbf16>,
    %cst_112 = arith.constant dense<0.000000e+00> : vector<8xf32>
    %72 = vector.multi_reduction <add>, %67, %cst_112 [1] : vector<8x128xf32> to vector<8xf32>
    %73 = vector.shape_cast %72 : vector<8xf32> to vector<8x1xf32>
    %74 = arith.mulf %67, %67 : vector<8x128xf32>
    %cst_113 = arith.constant dense<0.000000e+00> : vector<8xf32>
    %75 = vector.multi_reduction <add>, %74, %cst_113 [1] : vector<8x128xf32> to vector<8xf32>
    %76 = vector.shape_cast %75 : vector<8xf32> to vector<8x1xf32>
    %77 = arith.addf %50, %73 : vector<8x1xf32>
    %78 = arith.addf %51, %76 : vector<8x1xf32>
    %c0_114 = arith.constant 0 : index
    %c0_115 = arith.constant 0 : index
    %c1_116 = arith.constant 1 : index
    %c0_117 = arith.constant 0 : index
    %c16_118 = arith.constant 16 : index
    %79 = vector.load %arg2[%c0_114, %c0_115, %c1_116, %c0_117, %c16_118] : memref<1x1x3x4x160xbf16, #tpu.memory_space<vmem>>, vector<1x1x1x4x128xbf16>
    %80 = vector.shape_cast %79 : vector<1x1x1x4x128xbf16> to vector<4x128xbf16>
    %c0_119 = arith.constant 0 : index
    %c0_120 = arith.constant 0 : index
    %81 = vector.load %arg6[%c0_119, %c0_120] : memref<16x128xbf16, #tpu.memory_space<vmem>>, vector<4x128xbf16>
    tpu.vector_store %arg6[%c0_119, %c0_120], %80 {strides = array<i32>} : memref<16x128xbf16, #tpu.memory_space<vmem>>, vector<4x128xbf16>,
    %c0_121 = arith.constant 0 : index
    %c0_122 = arith.constant 0 : index
    %c2_123 = arith.constant 2 : index
    %c0_124 = arith.constant 0 : index
    %c16_125 = arith.constant 16 : index
    %82 = vector.load %arg2[%c0_121, %c0_122, %c2_123, %c0_124, %c16_125] : memref<1x1x3x4x160xbf16, #tpu.memory_space<vmem>>, vector<1x1x1x4x128xbf16>
    %83 = vector.shape_cast %82 : vector<1x1x1x4x128xbf16> to vector<4x128xbf16>
    %c4_126 = arith.constant 4 : index
    %c0_127 = arith.constant 0 : index
    %84 = vector.load %arg6[%c4_126, %c0_127] : memref<16x128xbf16, #tpu.memory_space<vmem>>, vector<4x128xbf16>
    tpu.vector_store %arg6[%c4_126, %c0_127], %83 {strides = array<i32>} : memref<16x128xbf16, #tpu.memory_space<vmem>>, vector<4x128xbf16>,
    %c0_128 = arith.constant 0 : index
    %c0_129 = arith.constant 0 : index
    %c1_130 = arith.constant 1 : index
    %c0_131 = arith.constant 0 : index
    %c32_132 = arith.constant 32 : index
    %85 = vector.load %arg2[%c0_128, %c0_129, %c1_130, %c0_131, %c32_132] : memref<1x1x3x4x160xbf16, #tpu.memory_space<vmem>>, vector<1x1x1x4x128xbf16>
    %86 = vector.shape_cast %85 : vector<1x1x1x4x128xbf16> to vector<4x128xbf16>
    %c8_133 = arith.constant 8 : index
    %c0_134 = arith.constant 0 : index
    %87 = vector.load %arg6[%c8_133, %c0_134] : memref<16x128xbf16, #tpu.memory_space<vmem>>, vector<4x128xbf16>
    tpu.vector_store %arg6[%c8_133, %c0_134], %86 {strides = array<i32>} : memref<16x128xbf16, #tpu.memory_space<vmem>>, vector<4x128xbf16>,
    %c0_135 = arith.constant 0 : index
    %c0_136 = arith.constant 0 : index
    %c2_137 = arith.constant 2 : index
    %c0_138 = arith.constant 0 : index
    %c32_139 = arith.constant 32 : index
    %88 = vector.load %arg2[%c0_135, %c0_136, %c2_137, %c0_138, %c32_139] : memref<1x1x3x4x160xbf16, #tpu.memory_space<vmem>>, vector<1x1x1x4x128xbf16>
    %89 = vector.shape_cast %88 : vector<1x1x1x4x128xbf16> to vector<4x128xbf16>
    %c12_140 = arith.constant 12 : index
    %c0_141 = arith.constant 0 : index
    %90 = vector.load %arg6[%c12_140, %c0_141] : memref<16x128xbf16, #tpu.memory_space<vmem>>, vector<4x128xbf16>
    tpu.vector_store %arg6[%c12_140, %c0_141], %89 {strides = array<i32>} : memref<16x128xbf16, #tpu.memory_space<vmem>>, vector<4x128xbf16>,
    %c3 = arith.constant 3 : index
    %c0_142 = arith.constant 0 : index
    %c0_143 = arith.constant 0 : index
    %91 = vector.load %arg3[%c3, %c0_142, %c0_143] : memref<4x8x16xbf16, #tpu.memory_space<vmem>>, vector<1x8x16xbf16>
    %92 = vector.shape_cast %91 : vector<1x8x16xbf16> to vector<8x16xbf16>
    %c0_144 = arith.constant 0 : index
    %c0_145 = arith.constant 0 : index
    %93 = vector.load %arg6[%c0_144, %c0_145] : memref<16x128xbf16, #tpu.memory_space<vmem>>, vector<16x128xbf16>
    %cst_146 = arith.constant dense<0.000000e+00> : vector<8x128xf32>
    %94 = tpu.matmul %92, %93, %cst_146 {dimension_numbers = #tpu.dot_dimension_numbers<[1], [0], [0], [1], [0, 0, 1, 1], [], []>} : vector<8x16xbf16>, vector<16x128xbf16>, vector<8x128xf32> -> vector<8x128xf32>
    %95 = arith.truncf %94 : vector<8x128xf32> to vector<8x128xbf16>
    %c0_147 = arith.constant 0 : index
    %c0_148 = arith.constant 0 : index
    %c3_149 = arith.constant 3 : index
    %c0_150 = arith.constant 0 : index
    %c0_151 = arith.constant 0 : index
    %96 = vector.load %arg4[%c0_147, %c0_148, %c3_149, %c0_150, %c0_151] : memref<1x1x4x8x128xbf16, #tpu.memory_space<vmem>>, vector<1x1x1x8x128xbf16>
    %97 = vector.shape_cast %96 : vector<1x1x1x8x128xbf16> to vector<8x128xbf16>
    %98 = vector.shape_cast %95 : vector<8x128xbf16> to vector<1x1x1x8x128xbf16>
    tpu.vector_store %arg4[%c0_147, %c0_148, %c3_149, %c0_150, %c0_151], %98 {strides = array<i32>} : memref<1x1x4x8x128xbf16, #tpu.memory_space<vmem>>, vector<1x1x1x8x128xbf16>,
    %cst_152 = arith.constant dense<0.000000e+00> : vector<8xf32>
    %99 = vector.multi_reduction <add>, %94, %cst_152 [1] : vector<8x128xf32> to vector<8xf32>
    %100 = vector.shape_cast %99 : vector<8xf32> to vector<8x1xf32>
    %101 = arith.mulf %94, %94 : vector<8x128xf32>
    %cst_153 = arith.constant dense<0.000000e+00> : vector<8xf32>
    %102 = vector.multi_reduction <add>, %101, %cst_153 [1] : vector<8x128xf32> to vector<8xf32>
    %103 = vector.shape_cast %102 : vector<8xf32> to vector<8x1xf32>
    %104 = arith.addf %77, %100 : vector<8x1xf32>
    %105 = arith.addf %78, %103 : vector<8x1xf32>
    %c0_154 = arith.constant 0 : index
    %c0_155 = arith.constant 0 : index
    %c0_156 = arith.constant 0 : index
    %c0_157 = arith.constant 0 : index
    %106 = vector.load %arg5[%c0_154, %c0_155, %c0_156, %c0_157] : memref<1x1x8x2xf32, #tpu.memory_space<vmem>>, vector<1x1x8x1xf32>
    %107 = vector.shape_cast %106 : vector<1x1x8x1xf32> to vector<8x1xf32>
    %108 = vector.shape_cast %104 : vector<8x1xf32> to vector<1x1x8x1xf32>
    tpu.vector_store %arg5[%c0_154, %c0_155, %c0_156, %c0_157], %108 {strides = array<i32>} : memref<1x1x8x2xf32, #tpu.memory_space<vmem>>, vector<1x1x8x1xf32>,
    %c0_158 = arith.constant 0 : index
    %c0_159 = arith.constant 0 : index
    %c0_160 = arith.constant 0 : index
    %c1_161 = arith.constant 1 : index
    %109 = vector.load %arg5[%c0_158, %c0_159, %c0_160, %c1_161] : memref<1x1x8x2xf32, #tpu.memory_space<vmem>>, vector<1x1x8x1xf32>
    %110 = vector.shape_cast %109 : vector<1x1x8x1xf32> to vector<8x1xf32>
    %111 = vector.shape_cast %105 : vector<8x1xf32> to vector<1x1x8x1xf32>
    tpu.vector_store %arg5[%c0_158, %c0_159, %c0_160, %c1_161], %111 {strides = array<i32>} : memref<1x1x8x2xf32, #tpu.memory_space<vmem>>, vector<1x1x8x1xf32>,
    return
  }
  func.func @transform_0(%arg0: i32, %arg1: i32) -> (i32, i32, i32, i32, i32) {
    %c0_i32 = arith.constant 0 : i32
    %c0_i32_0 = arith.constant 0 : i32
    %c0_i32_1 = arith.constant 0 : i32
    %c0_i32_2 = arith.constant 0 : i32
    return %arg0, %arg1, %c0_i32, %c0_i32_0, %c0_i32_1 : i32, i32, i32, i32, i32
  }
  func.func @transform_1(%arg0: i32, %arg1: i32) -> (i32, i32, i32) {
    %c0_i32 = arith.constant 0 : i32
    %c0_i32_0 = arith.constant 0 : i32
    %c0_i32_1 = arith.constant 0 : i32
    %c0_i32_2 = arith.constant 0 : i32
    return %c0_i32, %c0_i32_0, %c0_i32_1 : i32, i32, i32
  }
  func.func @transform_2(%arg0: i32, %arg1: i32) -> (i32, i32, i32, i32, i32) {
    %c0_i32 = arith.constant 0 : i32
    %c0_i32_0 = arith.constant 0 : i32
    %c0_i32_1 = arith.constant 0 : i32
    %c0_i32_2 = arith.constant 0 : i32
    return %arg0, %arg1, %c0_i32, %c0_i32_0, %c0_i32_1 : i32, i32, i32, i32, i32
  }
  func.func @transform_3(%arg0: i32, %arg1: i32) -> (i32, i32, i32, i32) {
    %c0_i32 = arith.constant 0 : i32
    %c0_i32_0 = arith.constant 0 : i32
    %c0_i32_1 = arith.constant 0 : i32
    return %arg0, %arg1, %c0_i32, %c0_i32_0 : i32, i32, i32, i32
  }
}

</mosaic_0001>

<llo_original>
// kernel: upsample_forward.1
$region0: #{upsample_forward.1}
  #allocation0 [shape = 'u32[]', space=smem, size = 0x4, offset = 0x4, fixed_abs, tag = 'smem constant byte address 0x4 - core index']
  #allocation1 [shape = 'u32[144,128]{1,0:T(1,128)}', space=vmem, size = 0x12000, scoped, tag = 'internal scratch']
  #allocation2 [shape = 'bf16[16,128]{1,0:T(16,128)(2,1)}', space=vmem, size = 0x1000, scoped, tag = 'scratch operand']
  %s0 = inlined_call_operand.vmem [shape: bf16[2,2,3,4,160], index: 0, kind: input, shape index: {}]
  %s1 = inlined_call_operand.vmem [shape: bf16[4,8,16], index: 1, kind: input, shape index: {}]
  %s2 = inlined_call_operand.vmem [shape: bf16[2,2,4,8,128], index: 2, kind: output, shape index: {0}]
  %s3 = inlined_call_operand.vmem [shape: f32[2,2,8,2], index: 3, kind: output, shape index: {1}]
  %4 = xla_tuple %s2, %s3
  %s5 = sld [smem:[#allocation0]]
  $region49: #{upsample_forward.1} parent=0
    _
  %s7 = ssub.s32 1, %s5
  %s8 = scalar_select 0, %s7, %s5
  loop: start=0, step=1, limit=6
  $region2: #{upsample_forward.1} parent=0 // loop_pre_header
    _
  $region3: #{upsample_forward.1} parent=0 // loop_header
    %s10 = sphi 0, %s14
    %p11 = scmp.ge.s32.totalorder %s10, 6
    %s17 = sphi 0, %s29
    %s18 = sphi 0, %s25
    %s19 = sphi 0, %s17
    %s20 = sphi 0, %s18
    %s21 = sphi 0, %s19
    %s22 = sphi 0, %s20
    %s34 = sphi 0, %s36
    %s37 = sphi 0, %s34
    %s38 = sphi 0, %s37
    %s54 = sphi 0, %s38
    %s58 = sphi 0, %s58
    %s60 = sphi 0, %s58
    %s61 = sphi 0, %s60
    %s75 = sphi 0, %s61
    %s83 = sphi 0, %s85
    %s86 = sphi 0, %s83
    %s87 = sphi 0, %s86
    %s103 = sphi 0, %s87
    %s111 = sphi 0, %s113
    %s114 = sphi 0, %s111
    %s115 = sphi 0, %s114
    %s131 = sphi 0, %s115
  $region4: #{upsample_forward.1} parent=0 // loop_header_branch
    %13 = sbr.rel (%p11) target = $region8
  $region5: #{upsample_forward.1} parent=0 // loop_body
    %s15 = ssub.s32 %s10, 1
    %s16 = ssub.s32 %s10, 2
    %s23 = sadd.s32 1, %s18
    %p24 = scmp.ge.s32.totalorder %s23, 2
    %s25 = scalar_select %p24, 0, %s23
    %s26 = sadd.s32 1, %s17
    %s27 = scalar_select %p24, %s26, %s17
    %p28 = scmp.ge.s32.totalorder %s27, 2
    %s29 = scalar_select %p28, 0, %s27
    %s30 = ssub.s32 %s17, %s29
    %s31 = ssub.s32 %s18, %s25
    %s32 = sor.u32 %s30, %s31
    %p33 = scmp.eq.s32.totalorder %s32, 0
    %s35 = sadd.s32 %s34, 1
    %s36 = scalar_select %p33, %s34, %s35
    %p39 = pneg %p33
    %p40 = scmp.eq.s32.totalorder %s10, 3
    %p41 = por %p39, %p40
    %p42 = scmp.ne.s32.totalorder %s34, %s37
    %p43 = scmp.eq.s32.totalorder %s10, 0
    %p44 = por %p42, %p43
    %p45 = scmp.ne.s32.totalorder %s34, %s37
    %p46 = scmp.eq.s32.totalorder %s15, 3
    %p47 = por %p45, %p46
    %p48 = scmp.ne.s32.totalorder %s37, %s38
    %p49 = scmp.eq.s32.totalorder %s15, 0
    %p50 = por %p48, %p49
    %p51 = scmp.ne.s32.totalorder %s37, %s38
    %p52 = scmp.eq.s32.totalorder %s16, 3
    %p53 = por %p51, %p52
    %p55 = scmp.ne.s32.totalorder %s38, %s54
    %p56 = scmp.eq.s32.totalorder %s16, 0
    %p57 = por %p55, %p56
    %s59 = sadd.s32 %s58, 1
    %p62 = scmp.eq.s32.totalorder %s10, 3
    %p63 = scmp.ne.s32.totalorder %s58, %s60
    %p64 = scmp.eq.s32.totalorder %s10, 0
    %p65 = por %p63, %p64
    %p66 = scmp.ne.s32.totalorder %s58, %s60
    %p67 = scmp.eq.s32.totalorder %s15, 3
    %p68 = por %p66, %p67
    %p69 = scmp.ne.s32.totalorder %s60, %s61
    %p70 = scmp.eq.s32.totalorder %s15, 0
    %p71 = por %p69, %p70
    %p72 = scmp.ne.s32.totalorder %s60, %s61
    %p73 = scmp.eq.s32.totalorder %s16, 3
    %p74 = por %p72, %p73
    %p76 = scmp.ne.s32.totalorder %s61, %s75
    %p77 = scmp.eq.s32.totalorder %s16, 0
    %p78 = por %p76, %p77
    %s79 = ssub.s32 %s17, %s29
    %s80 = ssub.s32 %s18, %s25
    %s81 = sor.u32 %s79, %s80
    %p82 = scmp.eq.s32.totalorder %s81, 0
    %s84 = sadd.s32 %s83, 1
    %s85 = scalar_select %p82, %s83, %s84
    %p88 = pneg %p82
    %p89 = scmp.eq.s32.totalorder %s10, 3
    %p90 = por %p88, %p89
    %p91 = scmp.ne.s32.totalorder %s83, %s86
    %p92 = scmp.eq.s32.totalorder %s10, 0
    %p93 = por %p91, %p92
    %p94 = scmp.ne.s32.totalorder %s83, %s86
    %p95 = scmp.eq.s32.totalorder %s15, 3
    %p96 = por %p94, %p95
    %p97 = scmp.ne.s32.totalorder %s86, %s87
    %p98 = scmp.eq.s32.totalorder %s15, 0
    %p99 = por %p97, %p98
    %p100 = scmp.ne.s32.totalorder %s86, %s87
    %p101 = scmp.eq.s32.totalorder %s16, 3
    %p102 = por %p100, %p101
    %p104 = scmp.ne.s32.totalorder %s87, %s103
    %p105 = scmp.eq.s32.totalorder %s16, 0
    %p106 = por %p104, %p105
    %s107 = ssub.s32 %s17, %s29
    %s108 = ssub.s32 %s18, %s25
    %s109 = sor.u32 %s107, %s108
    %p110 = scmp.eq.s32.totalorder %s109, 0
    %s112 = sadd.s32 %s111, 1
    %s113 = scalar_select %p110, %s111, %s112
    %p116 = pneg %p110
    %p117 = scmp.eq.s32.totalorder %s10, 3
    %p118 = por %p116, %p117
    %p119 = scmp.ne.s32.totalorder %s111, %s114
    %p120 = scmp.eq.s32.totalorder %s10, 0
    %p121 = por %p119, %p120
    %p122 = scmp.ne.s32.totalorder %s111, %s114
    %p123 = scmp.eq.s32.totalorder %s15, 3
    %p124 = por %p122, %p123
    %p125 = scmp.ne.s32.totalorder %s114, %s115
    %p126 = scmp.eq.s32.totalorder %s15, 0
    %p127 = por %p125, %p126
    %p128 = scmp.ne.s32.totalorder %s114, %s115
    %p129 = scmp.eq.s32.totalorder %s16, 3
    %p130 = por %p128, %p129
    %p132 = scmp.ne.s32.totalorder %s115, %s131
    %p133 = scmp.eq.s32.totalorder %s16, 0
    %p134 = por %p132, %p133
    %p135 = scmp.le.s32.totalorder 1, %s10
    %p136 = scmp.lt.s32.totalorder %s10, 5
    %p137 = pnand %p135, %p136
    %p138 = pneg %p137
    // Predicated region
    $region9: #{upsample_forward.1} parent=5 // pred_check
      _
    $region10: #{upsample_forward.1} parent=5 // pred_check_branch
      %140 = sbr.rel (%p137) target = $region12
    $region11: #{upsample_forward.1} parent=5 // pred_region
      %s141 = ssub.s32 %s10, 1
      // Predicated region
      $region13: #{upsample_forward.1} parent=11 // pred_check
        %p142 = pneg %p71
      $region14: #{upsample_forward.1} parent=11 // pred_check_branch
        %144 = sbr.rel (%p142) target = $region16
      $region15: #{upsample_forward.1} parent=11 // pred_region
        _
      $region16: #{upsample_forward.1} parent=11 // pred_fallthru
        _
    $region12: #{upsample_forward.1} parent=5 // pred_fallthru
      _
    %p145 = scmp.lt.s32.totalorder %s10, 4
    // Predicated region
    $region17: #{upsample_forward.1} parent=5 // pred_check
      %p146 = pneg %p145
    $region18: #{upsample_forward.1} parent=5 // pred_check_branch
      %148 = sbr.rel (%p146) target = $region20
    $region19: #{upsample_forward.1} parent=5 // pred_region
      // Predicated region
      $region21: #{upsample_forward.1} parent=19 // pred_check
        %p149 = pneg %p44
      $region22: #{upsample_forward.1} parent=19 // pred_check_branch
        %151 = sbr.rel (%p149) target = $region24
      $region23: #{upsample_forward.1} parent=19 // pred_region
        %p152 = scmp.lt.s32.totalorder %s17, 1
        %s153 = scalar_select %p152, %s17, 1
        %p154 = scmp.lt.s32.totalorder %s18, 1
        %s155 = scalar_select %p154, %s18, 1
        %s156 = smul.addr %s155, 6
        %s157 = smul.addr %s153, 12
        %s158 = sadd.s32 %s156, %s157
        %s159 = smul.addr %s158, 2
        %s160 = scalar_lea.vmem %s0, %s159
      $region24: #{upsample_forward.1} parent=19 // pred_fallthru
        _
    $region20: #{upsample_forward.1} parent=5 // pred_fallthru
      _
    %p161 = scmp.le.s32.totalorder 1, %s10
    %p162 = scmp.lt.s32.totalorder %s10, 5
    %p163 = pnand %p161, %p162
    %p164 = pneg %p163
    // Predicated region
    $region25: #{upsample_forward.1} parent=5 // pred_check
      _
    $region26: #{upsample_forward.1} parent=5 // pred_check_branch
      %166 = sbr.rel (%p163) target = $region28
    $region27: #{upsample_forward.1} parent=5 // pred_region
      %s167 = ssub.s32 %s10, 1
      %p168 = scmp.lt.s32.totalorder %s19, 1
      %s169 = scalar_select %p168, %s19, 1
      %p170 = scmp.lt.s32.totalorder %s20, 1
      %s171 = scalar_select %p170, %s20, 1
      %s172 = smul.addr %s171, 6
      %s173 = smul.addr %s169, 12
      %s174 = sadd.s32 %s172, %s173
      %s175 = smul.addr %s174, 2
      %s176 = scalar_lea.vmem %s0, %s175
      %p177 = pneg %p50
      %p178 = pneg %p47
      %p179 = pneg %p71
      %p180 = pneg %p68
      %p181 = pneg %p99
      %p182 = pneg %p96
      %p183 = scmp.lt.s32.totalorder %s19, 1
      %s184 = scalar_select %p183, %s19, 1
      %p185 = scmp.lt.s32.totalorder %s20, 1
      %s186 = scalar_select %p185, %s20, 1
      %s187 = smul.addr %s186, 4
      %s188 = smul.addr %s184, 8
      %s189 = sadd.s32 %s187, %s188
      %s190 = smul.addr %s189, 4
      %s191 = scalar_lea.vmem %s2, %s190
      %p192 = pneg %p127
      %p193 = pneg %p124
      %p194 = scmp.lt.s32.totalorder %s19, 1
      %s195 = scalar_select %p194, %s19, 1
      %p196 = scmp.lt.s32.totalorder %s20, 1
      %s197 = scalar_select %p196, %s20, 1
      %s198 = smul.addr %s195, 2
      %s199 = sadd.s32 %s197, %s198
      %s200 = smul.addr %s199, 8
      %s201 = scalar_lea.vmem %s3, %s200
      %p202 = scmp.lt.s32.totalorder %s19, 1
      %s203 = scalar_select %p202, %s19, 1
      %p204 = scmp.lt.s32.totalorder %s20, 1
      %s205 = scalar_select %p204, %s20, 1
      %s206 = smul.addr %s205, 6
      %s207 = smul.addr %s203, 12
      %s208 = sadd.s32 %s206, %s207
      %s209 = smul.addr %s208, 2
      %s210 = scalar_lea.vmem %s0, %s209
      %p211 = scmp.lt.s32.totalorder %s19, 1
      %s212 = scalar_select %p211, %s19, 1
      %p213 = scmp.lt.s32.totalorder %s20, 1
      %s214 = scalar_select %p213, %s20, 1
      %s215 = smul.addr %s214, 4
      %s216 = smul.addr %s212, 8
      %s217 = sadd.s32 %s215, %s216
      %s218 = smul.addr %s217, 4
      %s219 = scalar_lea.vmem %s2, %s218
      %p220 = scmp.lt.s32.totalorder %s19, 1
      %s221 = scalar_select %p220, %s19, 1
      %p222 = scmp.lt.s32.totalorder %s20, 1
      %s223 = scalar_select %p222, %s20, 1
      %s224 = smul.addr %s221, 2
      %s225 = sadd.s32 %s223, %s224
      %s226 = smul.addr %s225, 8
      %s227 = scalar_lea.vmem %s3, %s226
      %v229 = vld [vmem:[%s210] sm:$0x3]
      %230 = vst [vmem:[#allocation2] sm:$0x3] %v229
      %s231 = scalar_lea.vmem %s210, 4
      %v232 = vld [vmem:[%s231] sm:$0x3]
      %v234 = vcombine.low %v232, %v232
      %v236 = vunpack.c.l.s4 1983009808
      %v237 = vunpack.c.0.s8 %v236
      %v238 = vlaneseq
      %v239 = vshrl.u32 %v238, 7
      %v240 = vsub.s32 %v237, %v239
      %v241 = vrot.slane %v234, %v240
      %243 = vst [vmem:[#allocation2] sm:$0xc] %v241
      %v244 = vld [vmem:[%s210] sm:$0xf]
      %v247 = vunpack.c.l.s4 1983009808
      %v248 = vunpack.c.0.s8 %v247
      %v249 = vlaneseq
      %v250 = vshrl.u32 %v249, 7
      %v251 = vsub.s32 %v248, %v250
      %v252 = vrot.slane %v244, %v251
      %v253 = vcombine.low %v252, %v252
      %254 = vrot.lane.b32.xlu0 %v253, 112
      %v255 = vpop.permute.xlu0 %254
      %256 = vrot.lane.b32.xlu0 %v252, 112
      %v257 = vpop.permute.xlu0 %256
      %vm258 = vcmask 916480
      %v259 = vsel %vm258, %v255, %v257
      %261 = vst [vmem:[#allocation2] sm:$0x30] %v259
      %v262 = vld [vmem:[%s231] sm:$0xf]
      %v264 = vcombine.low %v262, %v262
      %v266 = vunpack.c.l.s4 1983009808
      %v267 = vunpack.c.0.s8 %v266
      %v268 = vlaneseq
      %v269 = vshrl.u32 %v268, 7
      %v270 = vsub.s32 %v267, %v269
      %v271 = vrot.slane %v264, %v270
      %v272 = vcombine.low %v271, %v271
      %273 = vrot.lane.b32.xlu0 %v272, 112
      %v274 = vpop.permute.xlu0 %273
      %275 = vrot.lane.b32.xlu0 %v271, 112
      %v276 = vpop.permute.xlu0 %275
      %v277 = vsel %vm258, %v274, %v276
      %279 = vst [vmem:[#allocation2] sm:$0xc0] %v277
      %v280 = vld [vmem:[%s1] sm:$0xf]
      %v281 = vld [vmem:[#allocation2] sm:$0xff]
      %vm282 = vcmask 130048
      %v284 = vsel %vm282, %v280, 0
      %286 = vmatprep.subr.bf16.mxu0 0
      %287 = vmatpush1.bf16.msra.mxu0 %v281
      %288 = vmatprep.subr.bf16.mxu0 0
      %289 = vmatpush1.bf16.msra.mxu0 0
      %290 = vmatprep.subr.bf16.mxu0 0
      %291 = vmatpush1.bf16.msra.mxu0 0
      %292 = vmatprep.subr.bf16.mxu0 0
      %293 = vmatpush1.bf16.msra.mxu0 0
      %294 = vmatprep.subr.bf16.mxu0 0
      %295 = vmatpush1.bf16.msra.mxu0 0
      %296 = vmatprep.subr.bf16.mxu0 0
      %297 = vmatpush1.bf16.msra.mxu0 0
      %298 = vmatprep.subr.bf16.mxu0 0
      %299 = vmatpush1.bf16.msra.mxu0 0
      %300 = vmatprep.subr.bf16.mxu0 0
      %301 = vmatpush1.bf16.msra.mxu0 0
      %302 = vmatprep.subr.bf16.mxu0 0
      %303 = vmatpush1.bf16.msra.mxu0 0
      %304 = vmatprep.subr.bf16.mxu0 0
      %305 = vmatpush1.bf16.msra.mxu0 0
      %306 = vmatprep.subr.bf16.mxu0 0
      %307 = vmatpush1.bf16.msra.mxu0 0
      %308 = vmatprep.subr.bf16.mxu0 0
      %309 = vmatpush1.bf16.msra.mxu0 0
      %310 = vmatprep.subr.bf16.mxu0 0
      %311 = vmatpush1.bf16.msra.mxu0 0
      %312 = vmatprep.subr.bf16.mxu0 0
      %313 = vmatpush1.bf16.msra.mxu0 0
      %314 = vmatprep.subr.bf16.mxu0 0
      %315 = vmatpush1.bf16.msra.mxu0 0
      %316 = vmatprep.subr.bf16.mxu0 0
      %317 = vmatpush1.bf16.msra.mxu0 0
      %318 = vmatprep.mubr.bf16.mxu0 0
      %319 = vmatmul.mubr.bf16.gmra.mrb[0].mxu0 %v284
      %v320 = vpop.f32.mrb[0].mxu0
      %v321 = vadd.f32 0.0, %v320
      %v322 = vpop.f32.mrb[0].mxu0
      %v323 = vpop.f32.mrb[0].mxu0
      %v324 = vpop.f32.mrb[0].mxu0
      %325 = vdwg.mxu0
      %v326 = vpack.c.bf16 %v321, %v321
      %327 = vst [vmem:[%s219] sm:$0xf] %v326
      %328 = vadd.xlane.f32.xlu0 %v321
      %v329 = vpop.xlane.xlu0 %328
      %v330 = vmul.f32 %v321, %v321
      %331 = vadd.xlane.f32.xlu0 %v330
      %v332 = vpop.xlane.xlu0 %331
      %v333 = vld [vmem:[%s231] sm:$0x3]
      %334 = vst [vmem:[#allocation2] sm:$0x3] %v333
      %s335 = scalar_lea.vmem %s210, 8
      %v336 = vld [vmem:[%s335] sm:$0x3]
      %v338 = vcombine.low %v336, %v336
      %v340 = vunpack.c.l.s4 1983009808
      %v341 = vunpack.c.0.s8 %v340
      %v342 = vlaneseq
      %v343 = vshrl.u32 %v342, 7
      %v344 = vsub.s32 %v341, %v343
      %v345 = vrot.slane %v338, %v344
      %347 = vst [vmem:[#allocation2] sm:$0xc] %v345
      %v348 = vld [vmem:[%s231] sm:$0xf]
      %v351 = vunpack.c.l.s4 1983009808
      %v352 = vunpack.c.0.s8 %v351
      %v353 = vlaneseq
      %v354 = vshrl.u32 %v353, 7
      %v355 = vsub.s32 %v352, %v354
      %v356 = vrot.slane %v348, %v355
      %v357 = vcombine.low %v356, %v356
      %358 = vrot.lane.b32.xlu0 %v357, 112
      %v359 = vpop.permute.xlu0 %358
      %360 = vrot.lane.b32.xlu0 %v356, 112
      %v361 = vpop.permute.xlu0 %360
      %v362 = vsel %vm258, %v359, %v361
      %364 = vst [vmem:[#allocation2] sm:$0x30] %v362
      %v365 = vld [vmem:[%s335] sm:$0xf]
      %v367 = vcombine.low %v365, %v365
      %v369 = vunpack.c.l.s4 1983009808
      %v370 = vunpack.c.0.s8 %v369
      %v371 = vlaneseq
      %v372 = vshrl.u32 %v371, 7
      %v373 = vsub.s32 %v370, %v372
      %v374 = vrot.slane %v367, %v373
      %v375 = vcombine.low %v374, %v374
      %376 = vrot.lane.b32.xlu0 %v375, 112
      %v377 = vpop.permute.xlu0 %376
      %378 = vrot.lane.b32.xlu0 %v374, 112
      %v379 = vpop.permute.xlu0 %378
      %v380 = vsel %vm258, %v377, %v379
      %382 = vst [vmem:[#allocation2] sm:$0xc0] %v380
      %s383 = scalar_lea.vmem %s1, 4
      %v384 = vld [vmem:[%s383] sm:$0xf]
      %v385 = vld [vmem:[#allocation2] sm:$0xff]
      %v387 = vsel %vm282, %v384, 0
      %389 = vmatprep.subr.bf16.mxu0 0
      %390 = vmatpush1.bf16.msra.mxu0 %v385
      %391 = vmatprep.subr.bf16.mxu0 0
      %392 = vmatpush1.bf16.msra.mxu0 0
      %393 = vmatprep.subr.bf16.mxu0 0
      %394 = vmatpush1.bf16.msra.mxu0 0
      %395 = vmatprep.subr.bf16.mxu0 0
      %396 = vmatpush1.bf16.msra.mxu0 0
      %397 = vmatprep.subr.bf16.mxu0 0
      %398 = vmatpush1.bf16.msra.mxu0 0
      %399 = vmatprep.subr.bf16.mxu0 0
      %400 = vmatpush1.bf16.msra.mxu0 0
      %401 = vmatprep.subr.bf16.mxu0 0
      %402 = vmatpush1.bf16.msra.mxu0 0
      %403 = vmatprep.subr.bf16.mxu0 0
      %404 = vmatpush1.bf16.msra.mxu0 0
      %405 = vmatprep.subr.bf16.mxu0 0
      %406 = vmatpush1.bf16.msra.mxu0 0
      %407 = vmatprep.subr.bf16.mxu0 0
      %408 = vmatpush1.bf16.msra.mxu0 0
      %409 = vmatprep.subr.bf16.mxu0 0
      %410 = vmatpush1.bf16.msra.mxu0 0
      %411 = vmatprep.subr.bf16.mxu0 0
      %412 = vmatpush1.bf16.msra.mxu0 0
      %413 = vmatprep.subr.bf16.mxu0 0
      %414 = vmatpush1.bf16.msra.mxu0 0
      %415 = vmatprep.subr.bf16.mxu0 0
      %416 = vmatpush1.bf16.msra.mxu0 0
      %417 = vmatprep.subr.bf16.mxu0 0
      %418 = vmatpush1.bf16.msra.mxu0 0
      %419 = vmatprep.subr.bf16.mxu0 0
      %420 = vmatpush1.bf16.msra.mxu0 0
      %421 = vmatprep.mubr.bf16.mxu0 0
      %422 = vmatmul.mubr.bf16.gmra.mrb[0].mxu0 %v387
      %v423 = vpop.f32.mrb[0].mxu0
      %v424 = vadd.f32 0.0, %v423
      %v425 = vpop.f32.mrb[0].mxu0
      %v426 = vpop.f32.mrb[0].mxu0
      %v427 = vpop.f32.mrb[0].mxu0
      %428 = vdwg.mxu0
      %v429 = vpack.c.bf16 %v424, %v424
      %s430 = scalar_lea.vmem %s219, 4
      %431 = vst [vmem:[%s430] sm:$0xf] %v429
      %432 = vadd.xlane.f32.xlu0 %v424
      %v433 = vpop.xlane.xlu0 %432
      %v434 = vmul.f32 %v424, %v424
      %435 = vadd.xlane.f32.xlu0 %v434
      %v436 = vpop.xlane.xlu0 %435
      %v437 = vadd.f32 %v329, %v433
      %v438 = vadd.f32 %v332, %v436
      %v439 = vld [vmem:[%s210] sm:$0xf]
      %v442 = vunpack.c.l.s4 1983009808
      %v443 = vunpack.c.0.s8 %v442
      %v444 = vlaneseq
      %v445 = vshrl.u32 %v444, 7
      %v446 = vsub.s32 %v443, %v445
      %v447 = vrot.slane %v439, %v446
      %v448 = vcombine.high %v447, %v447
      %449 = vrot.lane.b32.xlu0 %v447, 112
      %v450 = vpop.permute.xlu0 %449
      %451 = vrot.lane.b32.xlu0 %v448, 112
      %v452 = vpop.permute.xlu0 %451
      %v453 = vsel %vm258, %v450, %v452
      %455 = vst [vmem:[#allocation2] sm:$0x3] %v453
      %v456 = vld [vmem:[%s231] sm:$0xf]
      %v458 = vcombine.low %v456, %v456
      %v460 = vunpack.c.l.s4 1983009808
      %v461 = vunpack.c.0.s8 %v460
      %v462 = vlaneseq
      %v463 = vshrl.u32 %v462, 7
      %v464 = vsub.s32 %v461, %v463
      %v465 = vrot.slane %v458, %v464
      %v466 = vcombine.high %v465, %v465
      %467 = vrot.lane.b32.xlu0 %v465, 112
      %v468 = vpop.permute.xlu0 %467
      %469 = vrot.lane.b32.xlu0 %v466, 112
      %v470 = vpop.permute.xlu0 %469
      %v471 = vsel %vm258, %v468, %v470
      %473 = vst [vmem:[#allocation2] sm:$0xc] %v471
      %v474 = vld [vmem:[%s210] sm:$0xf]
      %v477 = vunpack.c.l.s4 1983009808
      %v478 = vunpack.c.0.s8 %v477
      %v479 = vlaneseq
      %v480 = vshrl.u32 %v479, 7
      %v481 = vsub.s32 %v478, %v480
      %v482 = vrot.slane %v474, %v481
      %v483 = vcombine.low %v482, %v482
      %484 = vrot.lane.b32.xlu0 %v483, 96
      %v485 = vpop.permute.xlu0 %484
      %486 = vrot.lane.b32.xlu0 %v482, 96
      %v487 = vpop.permute.xlu0 %486
      %vm488 = vcmask 785408
      %v489 = vsel %vm488, %v485, %v487
      %491 = vst [vmem:[#allocation2] sm:$0x30] %v489
      %v492 = vld [vmem:[%s231] sm:$0xf]
      %v494 = vcombine.low %v492, %v492
      %v496 = vunpack.c.l.s4 1983009808
      %v497 = vunpack.c.0.s8 %v496
      %v498 = vlaneseq
      %v499 = vshrl.u32 %v498, 7
      %v500 = vsub.s32 %v497, %v499
      %v501 = vrot.slane %v494, %v500
      %v502 = vcombine.low %v501, %v501
      %503 = vrot.lane.b32.xlu0 %v502, 96
      %v504 = vpop.permute.xlu0 %503
      %505 = vrot.lane.b32.xlu0 %v501, 96
      %v506 = vpop.permute.xlu0 %505
      %v507 = vsel %vm488, %v504, %v506
      %509 = vst [vmem:[#allocation2] sm:$0xc0] %v507
      %s510 = scalar_lea.vmem %s1, 8
      %v511 = vld [vmem:[%s510] sm:$0xf]
      %v512 = vld [vmem:[#allocation2] sm:$0xff]
      %v514 = vsel %vm282, %v511, 0
      %516 = vmatprep.subr.bf16.mxu0 0
      %517 = vmatpush1.bf16.msra.mxu0 %v512
      %518 = vmatprep.subr.bf16.mxu0 0
      %519 = vmatpush1.bf16.msra.mxu0 0
      %520 = vmatprep.subr.bf16.mxu0 0
      %521 = vmatpush1.bf16.msra.mxu0 0
      %522 = vmatprep.subr.bf16.mxu0 0
      %523 = vmatpush1.bf16.msra.mxu0 0
      %524 = vmatprep.subr.bf16.mxu0 0
      %525 = vmatpush1.bf16.msra.mxu0 0
      %526 = vmatprep.subr.bf16.mxu0 0
      %527 = vmatpush1.bf16.msra.mxu0 0
      %528 = vmatprep.subr.bf16.mxu0 0
      %529 = vmatpush1.bf16.msra.mxu0 0
      %530 = vmatprep.subr.bf16.mxu0 0
      %531 = vmatpush1.bf16.msra.mxu0 0
      %532 = vmatprep.subr.bf16.mxu0 0
      %533 = vmatpush1.bf16.msra.mxu0 0
      %534 = vmatprep.subr.bf16.mxu0 0
      %535 = vmatpush1.bf16.msra.mxu0 0
      %536 = vmatprep.subr.bf16.mxu0 0
      %537 = vmatpush1.bf16.msra.mxu0 0
      %538 = vmatprep.subr.bf16.mxu0 0
      %539 = vmatpush1.bf16.msra.mxu0 0
      %540 = vmatprep.subr.bf16.mxu0 0
      %541 = vmatpush1.bf16.msra.mxu0 0
      %542 = vmatprep.subr.bf16.mxu0 0
      %543 = vmatpush1.bf16.msra.mxu0 0
      %544 = vmatprep.subr.bf16.mxu0 0
      %545 = vmatpush1.bf16.msra.mxu0 0
      %546 = vmatprep.subr.bf16.mxu0 0
      %547 = vmatpush1.bf16.msra.mxu0 0
      %548 = vmatprep.mubr.bf16.mxu0 0
      %549 = vmatmul.mubr.bf16.gmra.mrb[0].mxu0 %v514
      %v550 = vpop.f32.mrb[0].mxu0
      %v551 = vadd.f32 0.0, %v550
      %v552 = vpop.f32.mrb[0].mxu0
      %v553 = vpop.f32.mrb[0].mxu0
      %v554 = vpop.f32.mrb[0].mxu0
      %555 = vdwg.mxu0
      %v556 = vpack.c.bf16 %v551, %v551
      %s557 = scalar_lea.vmem %s219, 8
      %558 = vst [vmem:[%s557] sm:$0xf] %v556
      %559 = vadd.xlane.f32.xlu0 %v551
      %v560 = vpop.xlane.xlu0 %559
      %v561 = vmul.f32 %v551, %v551
      %562 = vadd.xlane.f32.xlu0 %v561
      %v563 = vpop.xlane.xlu0 %562
      %v564 = vadd.f32 %v437, %v560
      %v565 = vadd.f32 %v438, %v563
      %v566 = vld [vmem:[%s231] sm:$0xf]
      %v569 = vunpack.c.l.s4 1983009808
      %v570 = vunpack.c.0.s8 %v569
      %v571 = vlaneseq
      %v572 = vshrl.u32 %v571, 7
      %v573 = vsub.s32 %v570, %v572
      %v574 = vrot.slane %v566, %v573
      %v575 = vcombine.high %v574, %v574
      %576 = vrot.lane.b32.xlu0 %v574, 112
      %v577 = vpop.permute.xlu0 %576
      %578 = vrot.lane.b32.xlu0 %v575, 112
      %v579 = vpop.permute.xlu0 %578
      %v580 = vsel %vm258, %v577, %v579
      %582 = vst [vmem:[#allocation2] sm:$0x3] %v580
      %v583 = vld [vmem:[%s335] sm:$0xf]
      %v585 = vcombine.low %v583, %v583
      %v587 = vunpack.c.l.s4 1983009808
      %v588 = vunpack.c.0.s8 %v587
      %v589 = vlaneseq
      %v590 = vshrl.u32 %v589, 7
      %v591 = vsub.s32 %v588, %v590
      %v592 = vrot.slane %v585, %v591
      %v593 = vcombine.high %v592, %v592
      %594 = vrot.lane.b32.xlu0 %v592, 112
      %v595 = vpop.permute.xlu0 %594
      %596 = vrot.lane.b32.xlu0 %v593, 112
      %v597 = vpop.permute.xlu0 %596
      %v598 = vsel %vm258, %v595, %v597
      %600 = vst [vmem:[#allocation2] sm:$0xc] %v598
      %v601 = vld [vmem:[%s231] sm:$0xf]
      %v604 = vunpack.c.l.s4 1983009808
      %v605 = vunpack.c.0.s8 %v604
      %v606 = vlaneseq
      %v607 = vshrl.u32 %v606, 7
      %v608 = vsub.s32 %v605, %v607
      %v609 = vrot.slane %v601, %v608
      %v610 = vcombine.low %v609, %v609
      %611 = vrot.lane.b32.xlu0 %v610, 96
      %v612 = vpop.permute.xlu0 %611
      %613 = vrot.lane.b32.xlu0 %v609, 96
      %v614 = vpop.permute.xlu0 %613
      %v615 = vsel %vm488, %v612, %v614
      %617 = vst [vmem:[#allocation2] sm:$0x30] %v615
      %v618 = vld [vmem:[%s335] sm:$0xf]
      %v620 = vcombine.low %v618, %v618
      %v622 = vunpack.c.l.s4 1983009808
      %v623 = vunpack.c.0.s8 %v622
      %v624 = vlaneseq
      %v625 = vshrl.u32 %v624, 7
      %v626 = vsub.s32 %v623, %v625
      %v627 = vrot.slane %v620, %v626
      %v628 = vcombine.low %v627, %v627
      %629 = vrot.lane.b32.xlu0 %v628, 96
      %v630 = vpop.permute.xlu0 %629
      %631 = vrot.lane.b32.xlu0 %v627, 96
      %v632 = vpop.permute.xlu0 %631
      %v633 = vsel %vm488, %v630, %v632
      %635 = vst [vmem:[#allocation2] sm:$0xc0] %v633
      %s636 = scalar_lea.vmem %s1, 12
      %v637 = vld [vmem:[%s636] sm:$0xf]
      %v638 = vld [vmem:[#allocation2] sm:$0xff]
      %v640 = vsel %vm282, %v637, 0
      %642 = vmatprep.subr.bf16.mxu0 0
      %643 = vmatpush1.bf16.msra.mxu0 %v638
      %644 = vmatprep.subr.bf16.mxu0 0
      %645 = vmatpush1.bf16.msra.mxu0 0
      %646 = vmatprep.subr.bf16.mxu0 0
      %647 = vmatpush1.bf16.msra.mxu0 0
      %648 = vmatprep.subr.bf16.mxu0 0
      %649 = vmatpush1.bf16.msra.mxu0 0
      %650 = vmatprep.subr.bf16.mxu0 0
      %651 = vmatpush1.bf16.msra.mxu0 0
      %652 = vmatprep.subr.bf16.mxu0 0
      %653 = vmatpush1.bf16.msra.mxu0 0
      %654 = vmatprep.subr.bf16.mxu0 0
      %655 = vmatpush1.bf16.msra.mxu0 0
      %656 = vmatprep.subr.bf16.mxu0 0
      %657 = vmatpush1.bf16.msra.mxu0 0
      %658 = vmatprep.subr.bf16.mxu0 0
      %659 = vmatpush1.bf16.msra.mxu0 0
      %660 = vmatprep.subr.bf16.mxu0 0
      %661 = vmatpush1.bf16.msra.mxu0 0
      %662 = vmatprep.subr.bf16.mxu0 0
      %663 = vmatpush1.bf16.msra.mxu0 0
      %664 = vmatprep.subr.bf16.mxu0 0
      %665 = vmatpush1.bf16.msra.mxu0 0
      %666 = vmatprep.subr.bf16.mxu0 0
      %667 = vmatpush1.bf16.msra.mxu0 0
      %668 = vmatprep.subr.bf16.mxu0 0
      %669 = vmatpush1.bf16.msra.mxu0 0
      %670 = vmatprep.subr.bf16.mxu0 0
      %671 = vmatpush1.bf16.msra.mxu0 0
      %672 = vmatprep.subr.bf16.mxu0 0
      %673 = vmatpush1.bf16.msra.mxu0 0
      %674 = vmatprep.mubr.bf16.mxu0 0
      %675 = vmatmul.mubr.bf16.gmra.mrb[0].mxu0 %v640
      %v676 = vpop.f32.mrb[0].mxu0
      %v677 = vadd.f32 0.0, %v676
      %v678 = vpop.f32.mrb[0].mxu0
      %v679 = vpop.f32.mrb[0].mxu0
      %v680 = vpop.f32.mrb[0].mxu0
      %681 = vdwg.mxu0
      %v682 = vpack.c.bf16 %v677, %v677
      %s683 = scalar_lea.vmem %s219, 12
      %684 = vst [vmem:[%s683] sm:$0xf] %v682
      %685 = vadd.xlane.f32.xlu0 %v677
      %v686 = vpop.xlane.xlu0 %685
      %v687 = vmul.f32 %v677, %v677
      %688 = vadd.xlane.f32.xlu0 %v687
      %v689 = vpop.xlane.xlu0 %688
      %v690 = vadd.f32 %v564, %v686
      %v691 = vadd.f32 %v565, %v689
      %vm692 = vcmask 7168
      %693 = vst.msk [vmem:[%s227] sm:$0xff] %vm692, %v690
      %vm694 = vcmask 15368
      %695 = vst.msk [vmem:[%s227] sm:$0xff] %vm694, %v691
      %p696 = scmp.lt.s32.totalorder %s19, 1
      %s697 = scalar_select %p696, %s19, 1
      %p698 = scmp.lt.s32.totalorder %s20, 1
      %s699 = scalar_select %p698, %s20, 1
      %s700 = smul.addr %s699, 4
      %s701 = smul.addr %s697, 8
      %s702 = sadd.s32 %s700, %s701
      %s703 = smul.addr %s702, 4
      %s704 = scalar_lea.vmem %s2, %s703
      %p705 = scmp.lt.s32.totalorder %s19, 1
      %s706 = scalar_select %p705, %s19, 1
      %p707 = scmp.lt.s32.totalorder %s20, 1
      %s708 = scalar_select %p707, %s20, 1
      %s709 = smul.addr %s706, 2
      %s710 = sadd.s32 %s708, %s709
      %s711 = smul.addr %s710, 8
      %s712 = scalar_lea.vmem %s3, %s711
      // Predicated region
      $region29: #{upsample_forward.1} parent=27 // pred_check
        %p713 = pneg %p96
      $region30: #{upsample_forward.1} parent=27 // pred_check_branch
        %715 = sbr.rel (%p713) target = $region32
      $region31: #{upsample_forward.1} parent=27 // pred_region
        _
      $region32: #{upsample_forward.1} parent=27 // pred_fallthru
        _
      // Predicated region
      $region33: #{upsample_forward.1} parent=27 // pred_check
        %p716 = pneg %p124
      $region34: #{upsample_forward.1} parent=27 // pred_check_branch
        %718 = sbr.rel (%p716) target = $region36
      $region35: #{upsample_forward.1} parent=27 // pred_region
        _
      $region36: #{upsample_forward.1} parent=27 // pred_fallthru
        _
    $region28: #{upsample_forward.1} parent=5 // pred_fallthru
      _
    %p719 = scmp.le.s32.totalorder 2, %s10
    // Predicated region
    $region37: #{upsample_forward.1} parent=5 // pred_check
      %p720 = pneg %p719
    $region38: #{upsample_forward.1} parent=5 // pred_check_branch
      %722 = sbr.rel (%p720) target = $region40
    $region39: #{upsample_forward.1} parent=5 // pred_region
      %s723 = ssub.s32 %s10, 2
      // Predicated region
      $region41: #{upsample_forward.1} parent=39 // pred_check
        %p724 = pneg %p102
      $region42: #{upsample_forward.1} parent=39 // pred_check_branch
        %726 = sbr.rel (%p724) target = $region44
      $region43: #{upsample_forward.1} parent=39 // pred_region
        %p727 = scmp.lt.s32.totalorder %s21, 1
        %s728 = scalar_select %p727, %s21, 1
        %p729 = scmp.lt.s32.totalorder %s22, 1
        %s730 = scalar_select %p729, %s22, 1
        %s731 = smul.addr %s730, 4
        %s732 = smul.addr %s728, 8
        %s733 = sadd.s32 %s731, %s732
        %s734 = smul.addr %s733, 4
        %s735 = scalar_lea.vmem %s2, %s734
      $region44: #{upsample_forward.1} parent=39 // pred_fallthru
        _
      // Predicated region
      $region45: #{upsample_forward.1} parent=39 // pred_check
        %p736 = pneg %p130
      $region46: #{upsample_forward.1} parent=39 // pred_check_branch
        %738 = sbr.rel (%p736) target = $region48
      $region47: #{upsample_forward.1} parent=39 // pred_region
        %p739 = scmp.lt.s32.totalorder %s21, 1
        %s740 = scalar_select %p739, %s21, 1
        %p741 = scmp.lt.s32.totalorder %s22, 1
        %s742 = scalar_select %p741, %s22, 1
        %s743 = smul.addr %s740, 2
        %s744 = sadd.s32 %s742, %s743
        %s745 = smul.addr %s744, 8
        %s746 = scalar_lea.vmem %s3, %s745
      $region48: #{upsample_forward.1} parent=39 // pred_fallthru
        _
    $region40: #{upsample_forward.1} parent=5 // pred_fallthru
      _
  $region6: #{upsample_forward.1} parent=0 // loop_footer
    %s14 = sadd.s32 1, %s10
  $region7: #{upsample_forward.1} parent=0 // loop_footer_branch
    %9 = sbr.rel target = $region3
  $region8: #{upsample_forward.1} parent=0 // loop_exit
    _

</llo_original>
